<compile_context>
chip_gen: v6e
topology: v6e:2x2x1
jax: 0.10.0
libtpu: 0.0.40
codegen_flags: <defaults>
</compile_context>

<pallas_src>
import functools

import jax
import jax.numpy as jnp
from jax.experimental import pallas as pl
from jax.experimental.pallas import tpu as pltpu


def _round_up(x, m):
    return (x + m - 1) // m * m


def _cdiv(a, b):
    return -(-a // b)


def _row_spec(shape):
    # Tiled along the batch (grid) axis.
    return pl.BlockSpec(shape, lambda i: (i, 0))


def _res_spec(shape):
    # Resident across all grid steps (weights / biases); block index constant.
    return pl.BlockSpec(shape, lambda i: (0, 0))


def _vmem_limit_bytes():
    """Per-generation VMEM limit with ~25% headroom (64 MiB on v7x, 128 on v5e/v6e)."""
    try:
        cap = pltpu.get_tpu_info().vmem_capacity_bytes
    except Exception:
        cap = 64 << 20  # conservative fallback (v7x-sized)
    return int(cap * 3 // 4)


def _mlp_kernel(obs_ref, act_ref, w1o_ref, w1a_ref, b1_ref,
                w2_ref, b2_ref, w3_ref, b3_ref, out_ref, *, out_dim):
    """Whole MLP hot path: fused concat + 3 matmuls + bias + ReLU.

    Feature dims are 128-padded inside the kernel for lane-dense MXU work,
    but only the first `out_dim` logit columns are stored to HBM.
    """
    obs = obs_ref[...].astype(jnp.bfloat16)   # no-op if inputs arrive as bf16
    act = act_ref[...].astype(jnp.bfloat16)

    # Layer 1: split-K matmul implements concat([obs, act]) @ W1 without the concat.
    h1 = (jnp.dot(obs, w1o_ref[...], preferred_element_type=jnp.float32)
          + jnp.dot(act, w1a_ref[...], preferred_element_type=jnp.float32)
          + b1_ref[...])
    h1 = jnp.maximum(h1, 0.0)

    h2 = jnp.dot(h1.astype(jnp.bfloat16), w2_ref[...],
                 preferred_element_type=jnp.float32) + b2_ref[...]
    h2 = jnp.maximum(h2, 0.0)

    h3 = jnp.dot(h2.astype(jnp.bfloat16), w3_ref[...],
                 preferred_element_type=jnp.float32) + b3_ref[...]

    # Only the real logit columns go back to HBM (padded columns are dropped here).
    out_ref[...] = h3[:, :out_dim]


def init_params(key, obs_dim, action_dim, hidden_dim, output_dim):
    """Deterministic synthetic parameters (PyTorch-Linear-like uniform init).

    Weights are stored [in_features, out_features]; biases as (1, out_features).
    """
    in_dim = obs_dim + action_dim
    dims = [(in_dim, hidden_dim), (hidden_dim, hidden_dim), (hidden_dim, output_dim)]
    params = []
    for fan_in, fan_out in dims:
        key, kw, kb = jax.random.split(key, 3)
        bound = 1.0 / jnp.sqrt(jnp.float32(fan_in))
        w = jax.random.uniform(kw, (fan_in, fan_out), jnp.float32, -bound, bound)
        b = jax.random.uniform(kb, (1, fan_out), jnp.float32, -bound, bound)
        params += [w, b]
    return tuple(params)


def discriminator_forward(obss, acts, params):
    """obss: [B, *obs_shape] (flattened inside), acts: [B, action_dim]."""
    w1, b1, w2, b2, w3, b3 = params  # f32 masters, [in, out] layout
    B = obss.shape[0]

    # Stream inputs in their incoming dtype; bf16 is passed straight through
    # (halves read bytes), anything exotic is normalized to f32. The bf16 cast
    # for the MXU happens inside the kernel.
    def _stream(x):
        return x if x.dtype in (jnp.bfloat16, jnp.float32) else x.astype(jnp.float32)

    obs_flat = _stream(obss.reshape(B, -1))
    acts = _stream(acts)
    obs_dim = obs_flat.shape[1]
    act_dim = acts.shape[1]
    hidden = w1.shape[1]
    out_dim = w3.shape[1]
    assert w1.shape[0] == obs_dim + act_dim

    # Lane-dense padded feature dims for the in-kernel matmuls only
    # (zeros are exact no-ops through the ReLU MLP; padded logit columns are
    # sliced off inside the kernel before the HBM store).
    H = _round_up(hidden, 128)
    O = _round_up(out_dim, 128)

    w1o = jnp.pad(w1[:obs_dim], ((0, 0), (0, H - hidden))).astype(jnp.bfloat16)
    w1a = jnp.pad(w1[obs_dim:], ((0, 0), (0, H - hidden))).astype(jnp.bfloat16)
    b1p = jnp.pad(b1, ((0, 0), (0, H - hidden)))
    w2p = jnp.pad(w2, ((0, H - hidden), (0, H - hidden))).astype(jnp.bfloat16)
    b2p = jnp.pad(b2, ((0, 0), (0, H - hidden)))
    w3p = jnp.pad(w3, ((0, H - hidden), (0, O - out_dim))).astype(jnp.bfloat16)
    b3p = jnp.pad(b3, ((0, 0), (0, O - out_dim)))

    # ---- Batch tiling --------------------------------------------------------
    # Cap the tile so the double-buffered row tiles (obs + act + out) stay
    # within a modest VMEM budget, then derive balanced tiles from B.
    bytes_per_row = ((obs_dim + act_dim) * obs_flat.dtype.itemsize
                     + out_dim * 4)
    tm_cap = max(512, min(4096, _round_up((8 << 20) // max(2 * bytes_per_row, 1), 8)))

    n_steps = max(_cdiv(B, tm_cap), 1)
    # Keep >=2 "parallel" grid steps when the batch is big enough so both v7x
    # TensorCores get work; harmless on single-TC v5e/v6e.
    if n_steps == 1 and B >= 512:
        n_steps = 2
    tm = _round_up(_cdiv(B, n_steps), 8)
    Bp = n_steps * tm

    if Bp != B:
        obs_flat = jnp.pad(obs_flat, ((0, Bp - B), (0, 0)))
        acts = jnp.pad(acts, ((0, Bp - B), (0, 0)))

    grid = (n_steps,)

    flops = 2 * Bp * (obs_dim * H + act_dim * H + H * H + H * O)
    bytes_accessed = (obs_flat.size * obs_flat.dtype.itemsize
                      + acts.size * acts.dtype.itemsize
                      + Bp * out_dim * 4                                   # unpadded output
                      + (w1o.size + w1a.size + w2p.size + w3p.size) * 2    # bf16 weights
                      + (b1p.size + b2p.size + b3p.size) * 4)              # f32 biases

    out = pl.pallas_call(
        functools.partial(_mlp_kernel, out_dim=out_dim),
        out_shape=jax.ShapeDtypeStruct((Bp, out_dim), jnp.float32),
        grid=grid,
        in_specs=[
            _row_spec((tm, obs_dim)),     # obs tile
            _row_spec((tm, act_dim)),     # act tile
            _res_spec((obs_dim, H)),      # W1[:obs_dim]
            _res_spec((act_dim, H)),      # W1[obs_dim:]
            _res_spec((1, H)),            # b1
            _res_spec((H, H)),            # W2
            _res_spec((1, H)),            # b2
            _res_spec((H, O)),            # W3
            _res_spec((1, O)),            # b3
        ],
        out_specs=_row_spec((tm, out_dim)),   # unpadded logits back to HBM
        compiler_params=pltpu.CompilerParams(
            dimension_semantics=("parallel",),        # megacore-shard batch on v7x
            vmem_limit_bytes=_vmem_limit_bytes(),     # per-generation, ~25% headroom
        ),
        cost_estimate=pl.CostEstimate(
            flops=flops, transcendentals=0, bytes_accessed=bytes_accessed),
    )(obs_flat, acts, w1o, w1a, b1p, w2p, b2p, w3p, b3p)

    return out[:B]


def reference_forward(obss, acts, params):
    B = obss.shape[0]
    x = jnp.concatenate(
        [obss.reshape(B, -1).astype(jnp.float32), acts.astype(jnp.float32)], axis=-1)
    w1, b1, w2, b2, w3, b3 = params
    h1 = jnp.maximum(x @ w1 + b1, 0.0)
    h2 = jnp.maximum(h1 @ w2 + b2, 0.0)
    return h2 @ w3 + b3


if __name__ == "__main__":
    batch = 2
    obs_shape = (4, 4)        # flattened inside forward -> obs_dim = 16
    obs_dim = 16
    action_dim = 4
    hidden_dim = 32
    output_dim = 1

    key = jax.random.PRNGKey(0)
    k_obs, k_act, k_par, k_obs2, k_act2 = jax.random.split(key, 5)

    obss = jax.random.normal(k_obs, (batch,) + obs_shape, jnp.float32)
    acts = jax.random.normal(k_act, (batch, action_dim), jnp.float32)
    params = init_params(k_par, obs_dim, action_dim, hidden_dim, output_dim)

    logits = jax.block_until_ready(discriminator_forward(obss, acts, params))
    ref = reference_forward(obss, acts, params)
    assert logits.shape == (batch, output_dim)
    assert jnp.allclose(logits, ref, atol=5e-2, rtol=5e-2), \
        float(jnp.max(jnp.abs(logits - ref)))

    # Larger batch exercises the balanced multi-step (2 x 264) "parallel" grid.
    big_b = 520
    obss_big = jax.random.normal(k_obs2, (big_b,) + obs_shape, jnp.float32)
    acts_big = jax.random.normal(k_act2, (big_b, action_dim), jnp.float32)
    logits_big = jax.block_until_ready(
        discriminator_forward(obss_big, acts_big, params))
    ref_big = reference_forward(obss_big, acts_big, params)
    assert logits_big.shape == (big_b, output_dim)
    assert jnp.allclose(logits_big, ref_big, atol=5e-2, rtol=5e-2), \
        float(jnp.max(jnp.abs(logits_big - ref_big)))

    # bf16 input streaming path (no wrapper-side f32 round trip); reference is
    # computed on the same bf16-rounded inputs so only kernel error remains.
    obss_bf = obss_big.astype(jnp.bfloat16)
    acts_bf = acts_big.astype(jnp.bfloat16)
    logits_bf = jax.block_until_ready(
        discriminator_forward(obss_bf, acts_bf, params))
    ref_bf = reference_forward(obss_bf.astype(jnp.float32),
                               acts_bf.astype(jnp.float32), params)
    assert logits_bf.shape == (big_b, output_dim)
    assert jnp.allclose(logits_bf, ref_bf, atol=5e-2, rtol=5e-2), \
        float(jnp.max(jnp.abs(logits_bf - ref_bf)))

    print("KERNEL_OK")
</pallas_src>

<mosaic_0001>
module attributes {stable_mosaic.version = 11 : i64} {
  func.func @_mlp_kernel(%arg0: i32, %arg1: memref<8x16xf32, #tpu.memory_space<vmem>>, %arg2: memref<8x4xf32, #tpu.memory_space<vmem>>, %arg3: memref<16x128xbf16, #tpu.memory_space<vmem>>, %arg4: memref<4x128xbf16, #tpu.memory_space<vmem>>, %arg5: memref<1x128xf32, #tpu.memory_space<vmem>>, %arg6: memref<128x128xbf16, #tpu.memory_space<vmem>>, %arg7: memref<1x128xf32, #tpu.memory_space<vmem>>, %arg8: memref<128x128xbf16, #tpu.memory_space<vmem>>, %arg9: memref<1x128xf32, #tpu.memory_space<vmem>>, %arg10: memref<8x1xf32, #tpu.memory_space<vmem>>) attributes {dimension_semantics = [#tpu.dimension_semantics<parallel>], iteration_bounds = array<i64: 1>, scalar_prefetch = 0 : i64, scratch_operands = 0 : i64, tpu.core_type = #tpu.core_type<tc>, window_params = [{transform_indices = @transform_0, window_bounds = array<i64: 8, 16>}, {transform_indices = @transform_1, window_bounds = array<i64: 8, 4>}, {pipeline_mode = #tpu.pipeline_mode<synchronous>, transform_indices = @transform_2, window_bounds = array<i64: 16, 128>}, {pipeline_mode = #tpu.pipeline_mode<synchronous>, transform_indices = @transform_3, window_bounds = array<i64: 4, 128>}, {pipeline_mode = #tpu.pipeline_mode<synchronous>, transform_indices = @transform_4, window_bounds = array<i64: 1, 128>}, {pipeline_mode = #tpu.pipeline_mode<synchronous>, transform_indices = @transform_5, window_bounds = array<i64: 128, 128>}, {pipeline_mode = #tpu.pipeline_mode<synchronous>, transform_indices = @transform_6, window_bounds = array<i64: 1, 128>}, {pipeline_mode = #tpu.pipeline_mode<synchronous>, transform_indices = @transform_7, window_bounds = array<i64: 128, 128>}, {pipeline_mode = #tpu.pipeline_mode<synchronous>, transform_indices = @transform_8, window_bounds = array<i64: 1, 128>}, {transform_indices = @transform_9, window_bounds = array<i64: 8, 1>}]} {
    %c0 = arith.constant 0 : index
    %c0_0 = arith.constant 0 : index
    %0 = vector.load %arg1[%c0, %c0_0] : memref<8x16xf32, #tpu.memory_space<vmem>>, vector<8x16xf32>
    %1 = arith.truncf %0 : vector<8x16xf32> to vector<8x16xbf16>
    %c0_1 = arith.constant 0 : index
    %c0_2 = arith.constant 0 : index
    %2 = vector.load %arg2[%c0_1, %c0_2] : memref<8x4xf32, #tpu.memory_space<vmem>>, vector<8x4xf32>
    %3 = arith.truncf %2 : vector<8x4xf32> to vector<8x4xbf16>
    %c0_3 = arith.constant 0 : index
    %c0_4 = arith.constant 0 : index
    %4 = vector.load %arg3[%c0_3, %c0_4] : memref<16x128xbf16, #tpu.memory_space<vmem>>, vector<16x128xbf16>
    %cst = arith.constant dense<0.000000e+00> : vector<8x128xf32>
    %5 = tpu.matmul %1, %4, %cst {dimension_numbers = #tpu.dot_dimension_numbers<[1], [0], [0], [1], [0, 0, 1, 1], [], []>} : vector<8x16xbf16>, vector<16x128xbf16>, vector<8x128xf32> -> vector<8x128xf32>
    %c0_5 = arith.constant 0 : index
    %c0_6 = arith.constant 0 : index
    %6 = vector.load %arg4[%c0_5, %c0_6] : memref<4x128xbf16, #tpu.memory_space<vmem>>, vector<4x128xbf16>
    %cst_7 = arith.constant dense<0.000000e+00> : vector<8x128xf32>
    %7 = tpu.matmul %3, %6, %cst_7 {dimension_numbers = #tpu.dot_dimension_numbers<[1], [0], [0], [1], [0, 0, 1, 1], [], []>} : vector<8x4xbf16>, vector<4x128xbf16>, vector<8x128xf32> -> vector<8x128xf32>
    %8 = arith.addf %5, %7 : vector<8x128xf32>
    %c0_8 = arith.constant 0 : index
    %c0_9 = arith.constant 0 : index
    %9 = vector.load %arg5[%c0_8, %c0_9] : memref<1x128xf32, #tpu.memory_space<vmem>>, vector<1x128xf32>
    %10 = vector.broadcast %9 : vector<1x128xf32> to vector<8x128xf32>
    %11 = arith.addf %8, %10 : vector<8x128xf32>
    %cst_10 = arith.constant 0.000000e+00 : f32
    %12 = vector.broadcast %cst_10 : f32 to vector<8x128xf32>
    %13 = arith.maximumf %11, %12 : vector<8x128xf32>
    %14 = arith.truncf %13 : vector<8x128xf32> to vector<8x128xbf16>
    %c0_11 = arith.constant 0 : index
    %c0_12 = arith.constant 0 : index
    %15 = vector.load %arg6[%c0_11, %c0_12] : memref<128x128xbf16, #tpu.memory_space<vmem>>, vector<128x128xbf16>
    %cst_13 = arith.constant dense<0.000000e+00> : vector<8x128xf32>
    %16 = tpu.matmul %14, %15, %cst_13 {dimension_numbers = #tpu.dot_dimension_numbers<[1], [0], [0], [1], [0, 0, 1, 1], [], []>} : vector<8x128xbf16>, vector<128x128xbf16>, vector<8x128xf32> -> vector<8x128xf32>
    %c0_14 = arith.constant 0 : index
    %c0_15 = arith.constant 0 : index
    %17 = vector.load %arg7[%c0_14, %c0_15] : memref<1x128xf32, #tpu.memory_space<vmem>>, vector<1x128xf32>
    %18 = vector.broadcast %17 : vector<1x128xf32> to vector<8x128xf32>
    %19 = arith.addf %16, %18 : vector<8x128xf32>
    %cst_16 = arith.constant 0.000000e+00 : f32
    %20 = vector.broadcast %cst_16 : f32 to vector<8x128xf32>
    %21 = arith.maximumf %19, %20 : vector<8x128xf32>
    %22 = arith.truncf %21 : vector<8x128xf32> to vector<8x128xbf16>
    %c0_17 = arith.constant 0 : index
    %c0_18 = arith.constant 0 : index
    %23 = vector.load %arg8[%c0_17, %c0_18] : memref<128x128xbf16, #tpu.memory_space<vmem>>, vector<128x128xbf16>
    %cst_19 = arith.constant dense<0.000000e+00> : vector<8x128xf32>
    %24 = tpu.matmul %22, %23, %cst_19 {dimension_numbers = #tpu.dot_dimension_numbers<[1], [0], [0], [1], [0, 0, 1, 1], [], []>} : vector<8x128xbf16>, vector<128x128xbf16>, vector<8x128xf32> -> vector<8x128xf32>
    %c0_20 = arith.constant 0 : index
    %c0_21 = arith.constant 0 : index
    %25 = vector.load %arg9[%c0_20, %c0_21] : memref<1x128xf32, #tpu.memory_space<vmem>>, vector<1x128xf32>
    %26 = vector.broadcast %25 : vector<1x128xf32> to vector<8x128xf32>
    %27 = arith.addf %24, %26 : vector<8x128xf32>
    %28 = vector.extract_strided_slice %27 {offsets = [0, 0], sizes = [8, 1], strides = [1, 1]} : vector<8x128xf32> to vector<8x1xf32>
    %c0_22 = arith.constant 0 : index
    %c0_23 = arith.constant 0 : index
    %29 = vector.load %arg10[%c0_22, %c0_23] : memref<8x1xf32, #tpu.memory_space<vmem>>, vector<8x1xf32>
    tpu.vector_store %arg10[%c0_22, %c0_23], %28 {strides = array<i32>} : memref<8x1xf32, #tpu.memory_space<vmem>>, vector<8x1xf32>,
    return
  }
  func.func @transform_0(%arg0: i32) -> (i32, i32) {
    %c0_i32 = arith.constant 0 : i32
    %c0_i32_0 = arith.constant 0 : i32
    return %arg0, %c0_i32 : i32, i32
  }
  func.func @transform_1(%arg0: i32) -> (i32, i32) {
    %c0_i32 = arith.constant 0 : i32
    %c0_i32_0 = arith.constant 0 : i32
    return %arg0, %c0_i32 : i32, i32
  }
  func.func @transform_2(%arg0: i32) -> (i32, i32) {
    %c0_i32 = arith.constant 0 : i32
    %c0_i32_0 = arith.constant 0 : i32
    %c0_i32_1 = arith.constant 0 : i32
    return %c0_i32, %c0_i32_0 : i32, i32
  }
  func.func @transform_3(%arg0: i32) -> (i32, i32) {
    %c0_i32 = arith.constant 0 : i32
    %c0_i32_0 = arith.constant 0 : i32
    %c0_i32_1 = arith.constant 0 : i32
    return %c0_i32, %c0_i32_0 : i32, i32
  }
  func.func @transform_4(%arg0: i32) -> (i32, i32) {
    %c0_i32 = arith.constant 0 : i32
    %c0_i32_0 = arith.constant 0 : i32
    %c0_i32_1 = arith.constant 0 : i32
    return %c0_i32, %c0_i32_0 : i32, i32
  }
  func.func @transform_5(%arg0: i32) -> (i32, i32) {
    %c0_i32 = arith.constant 0 : i32
    %c0_i32_0 = arith.constant 0 : i32
    %c0_i32_1 = arith.constant 0 : i32
    return %c0_i32, %c0_i32_0 : i32, i32
  }
  func.func @transform_6(%arg0: i32) -> (i32, i32) {
    %c0_i32 = arith.constant 0 : i32
    %c0_i32_0 = arith.constant 0 : i32
    %c0_i32_1 = arith.constant 0 : i32
    return %c0_i32, %c0_i32_0 : i32, i32
  }
  func.func @transform_7(%arg0: i32) -> (i32, i32) {
    %c0_i32 = arith.constant 0 : i32
    %c0_i32_0 = arith.constant 0 : i32
    %c0_i32_1 = arith.constant 0 : i32
    return %c0_i32, %c0_i32_0 : i32, i32
  }
  func.func @transform_8(%arg0: i32) -> (i32, i32) {
    %c0_i32 = arith.constant 0 : i32
    %c0_i32_0 = arith.constant 0 : i32
    %c0_i32_1 = arith.constant 0 : i32
    return %c0_i32, %c0_i32_0 : i32, i32
  }
  func.func @transform_9(%arg0: i32) -> (i32, i32) {
    %c0_i32 = arith.constant 0 : i32
    %c0_i32_0 = arith.constant 0 : i32
    return %arg0, %c0_i32 : i32, i32
  }
}

</mosaic_0001>

<llo_original>
// kernel: tpu_custom_call.1
$region0: #{tpu_custom_call.1}
  #allocation0 [shape = 'u32[]', space=smem, size = 0x4, offset = 0x4, fixed_abs, tag = 'smem constant byte address 0x4 - core index']
  #allocation1 [shape = 'u32[144,128]{1,0:T(1,128)}', space=vmem, size = 0x12000, scoped, tag = 'internal scratch']
  %s0 = inlined_call_operand.vmem [shape: f32[8,16], index: 0, kind: input, shape index: {}]
  %s1 = inlined_call_operand.vmem [shape: f32[8,4], index: 1, kind: input, shape index: {}]
  %s2 = inlined_call_operand.hbm [shape: bf16[16,128], index: 2, kind: input, shape index: {}]
  %s3 = inlined_call_operand.vmem [shape: bf16[4,128], index: 3, kind: input, shape index: {}]
  %s4 = inlined_call_operand.vmem [shape: f32[1,128], index: 4, kind: input, shape index: {}]
  %s5 = inlined_call_operand.hbm [shape: bf16[128,128], index: 5, kind: input, shape index: {}]
  %s6 = inlined_call_operand.vmem [shape: f32[1,128], index: 6, kind: input, shape index: {}]
  %s7 = inlined_call_operand.hbm [shape: bf16[128,128], index: 7, kind: input, shape index: {}]
  %s8 = inlined_call_operand.vmem [shape: f32[1,128], index: 8, kind: input, shape index: {}]
  %s9 = inlined_call_operand.vmem [shape: f32[8,1], index: 9, kind: output, shape index: {}]
  %s10 = sld [smem:[#allocation0]]
  $region58: #{tpu_custom_call.1} parent=0
    _
  %s12 = ssub.s32 1, %s10
  %s13 = scalar_select 0, %s12, %s10
  $region1: #{tpu_custom_call.1} parent=0
    #allocation2 [shape = 'u8[4096]{0}', space=vmem, size = 0x1000, scoped, tag = 'input window, operand 2, single buffered']
    #allocation3 [shape = 's32[1]{0}', space=sflag, size = 0x4, scoped, tag = 'scoped memory for tpu_custom_call.1']
    #allocation4 [shape = 'u8[32768]{0}', space=vmem, size = 0x8000, scoped, tag = 'input window, operand 5, single buffered']
    #allocation5 [shape = 's32[1]{0}', space=sflag, size = 0x4, scoped, tag = 'scoped memory for tpu_custom_call.1']
    #allocation6 [shape = 'u8[32768]{0}', space=vmem, size = 0x8000, scoped, tag = 'input window, operand 7, single buffered']
    %14 = vsyncpa [#allocation3], 0
    %15 = vsyncpa [#allocation5], 0
    // Predicated region
    $region2: #{tpu_custom_call.1} parent=1 // pred_check
      _
    $region3: #{tpu_custom_call.1} parent=1 // pred_check_branch
      %17 = sbr.rel (0) target = $region5
    $region4: #{tpu_custom_call.1} parent=1 // pred_region
      _
    $region5: #{tpu_custom_call.1} parent=1 // pred_fallthru
      _
    // Predicated region
    $region6: #{tpu_custom_call.1} parent=1 // pred_check
      _
    $region7: #{tpu_custom_call.1} parent=1 // pred_check_branch
      %19 = sbr.rel (0) target = $region9
    $region8: #{tpu_custom_call.1} parent=1 // pred_region
      _
    $region9: #{tpu_custom_call.1} parent=1 // pred_fallthru
      _
    // Predicated region
    $region10: #{tpu_custom_call.1} parent=1 // pred_check
      _
    $region11: #{tpu_custom_call.1} parent=1 // pred_check_branch
      %21 = sbr.rel (0) target = $region13
    $region12: #{tpu_custom_call.1} parent=1 // pred_region
      %s23 = ssub.s32 128, 128
      %24 = vsyncadd [#allocation3], %s23
      %s25 = sshll.u32 [#allocation2], 4
      %s26 = int_to_ptr.vmem [resolvable:$true] %s25
      %31 = dma.hbm_to_vmem [thread:$0]  %s2, 128, %s26, [#allocation3], 64, 64, 4
    $region13: #{tpu_custom_call.1} parent=1 // pred_fallthru
      _
    // Predicated region
    $region14: #{tpu_custom_call.1} parent=1 // pred_check
      _
    $region15: #{tpu_custom_call.1} parent=1 // pred_check_branch
      %33 = sbr.rel (0) target = $region17
    $region16: #{tpu_custom_call.1} parent=1 // pred_region
      _
    $region17: #{tpu_custom_call.1} parent=1 // pred_fallthru
      _
    // Predicated region
    $region18: #{tpu_custom_call.1} parent=1 // pred_check
      _
    $region19: #{tpu_custom_call.1} parent=1 // pred_check_branch
      %35 = sbr.rel (0) target = $region21
    $region20: #{tpu_custom_call.1} parent=1 // pred_region
      _
    $region21: #{tpu_custom_call.1} parent=1 // pred_fallthru
      _
    // Predicated region
    $region22: #{tpu_custom_call.1} parent=1 // pred_check
      _
    $region23: #{tpu_custom_call.1} parent=1 // pred_check_branch
      %37 = sbr.rel (0) target = $region25
    $region24: #{tpu_custom_call.1} parent=1 // pred_region
      %s39 = ssub.s32 1024, 1024
      %40 = vsyncadd [#allocation5], %s39
      %s41 = sshll.u32 [#allocation4], 4
      %s42 = int_to_ptr.vmem [resolvable:$true] %s41
      %47 = dma.hbm_to_vmem [thread:$0]  %s5, 1024, %s42, [#allocation5], 64, 64, 4
    $region25: #{tpu_custom_call.1} parent=1 // pred_fallthru
      _
    // Predicated region
    $region26: #{tpu_custom_call.1} parent=1 // pred_check
      _
    $region27: #{tpu_custom_call.1} parent=1 // pred_check_branch
      %49 = sbr.rel (0) target = $region29
    $region28: #{tpu_custom_call.1} parent=1 // pred_region
      _
    $region29: #{tpu_custom_call.1} parent=1 // pred_fallthru
      _
    // Predicated region
    $region30: #{tpu_custom_call.1} parent=1 // pred_check
      _
    $region31: #{tpu_custom_call.1} parent=1 // pred_check_branch
      %51 = sbr.rel (0) target = $region33
    $region32: #{tpu_custom_call.1} parent=1 // pred_region
      %s53 = ssub.s32 1024, 1024
      %54 = vsyncadd [#allocation5], %s53
      %s55 = sshll.u32 [#allocation6], 4
      %s56 = int_to_ptr.vmem [resolvable:$true] %s55
      %61 = dma.hbm_to_vmem [thread:$0]  %s7, 1024, %s56, [#allocation5], 64, 64, 4
    $region33: #{tpu_custom_call.1} parent=1 // pred_fallthru
      _
    // Predicated region
    $region34: #{tpu_custom_call.1} parent=1 // pred_check
      _
    $region35: #{tpu_custom_call.1} parent=1 // pred_check_branch
      %63 = sbr.rel (0) target = $region37
    $region36: #{tpu_custom_call.1} parent=1 // pred_region
      _
    $region37: #{tpu_custom_call.1} parent=1 // pred_fallthru
      _
    // Predicated region
    $region38: #{tpu_custom_call.1} parent=1 // pred_check
      _
    $region39: #{tpu_custom_call.1} parent=1 // pred_check_branch
      %65 = sbr.rel (0) target = $region41
    $region40: #{tpu_custom_call.1} parent=1 // pred_region
      %66 = dma.done [#allocation3], 128
    $region41: #{tpu_custom_call.1} parent=1 // pred_fallthru
      _
    // Predicated region
    $region42: #{tpu_custom_call.1} parent=1 // pred_check
      _
    $region43: #{tpu_custom_call.1} parent=1 // pred_check_branch
      %68 = sbr.rel (0) target = $region45
    $region44: #{tpu_custom_call.1} parent=1 // pred_region
      %69 = dma.done [#allocation5], 1024
    $region45: #{tpu_custom_call.1} parent=1 // pred_fallthru
      _
    // Predicated region
    $region46: #{tpu_custom_call.1} parent=1 // pred_check
      _
    $region47: #{tpu_custom_call.1} parent=1 // pred_check_branch
      %71 = sbr.rel (0) target = $region49
    $region48: #{tpu_custom_call.1} parent=1 // pred_region
      %72 = dma.done [#allocation5], 1024
    $region49: #{tpu_custom_call.1} parent=1 // pred_fallthru
      _
    %v74 = vld [vmem:[%s0] sm:$0xff]
    %v75 = vpack.c.bf16 %v74, %v74
    %v76 = vld [vmem:[%s1] sm:$0xff]
    %v77 = vpack.c.bf16 %v76, %v76
    %v78 = vld [vmem:[#allocation2] sm:$0xf]
    %v79 = vld [vmem:[#allocation2 + $0x4] sm:$0xf]
    %v80 = vld [vmem:[%s3] sm:$0x3]
    %vm81 = vcmask 31744
    %v83 = vsel %vm81, %v77, 0
    %vm85 = vcmask 1041408
    %v87 = vsel %vm85, %v80, 0
    %89 = vmatprep.subr.bf16.mxu0 0
    %90 = vmatpush1.bf16.msra.mxu0 0
    %91 = vmatprep.subr.bf16.mxu0 0
    %92 = vmatpush1.bf16.msra.mxu0 0
    %93 = vmatprep.subr.bf16.mxu0 0
    %94 = vmatpush1.bf16.msra.mxu0 0
    %95 = vmatprep.subr.bf16.mxu0 0
    %96 = vmatpush1.bf16.msra.mxu0 0
    %97 = vmatprep.subr.bf16.mxu0 0
    %98 = vmatpush1.bf16.msra.mxu0 0
    %99 = vmatprep.subr.bf16.mxu0 0
    %100 = vmatpush1.bf16.msra.mxu0 0
    %101 = vmatprep.subr.bf16.mxu0 0
    %102 = vmatpush1.bf16.msra.mxu0 0
    %103 = vmatprep.subr.bf16.mxu0 0
    %104 = vmatpush1.bf16.msra.mxu0 %v87
    %105 = vmatprep.subr.bf16.mxu0 0
    %106 = vmatpush2.bf16.msra.mxu0 0
    %107 = vmatprep.subr.bf16.mxu0 0
    %108 = vmatpush2.bf16.msra.mxu0 0
    %109 = vmatprep.subr.bf16.mxu0 0
    %110 = vmatpush2.bf16.msra.mxu0 0
    %111 = vmatprep.subr.bf16.mxu0 0
    %112 = vmatpush2.bf16.msra.mxu0 0
    %113 = vmatprep.subr.bf16.mxu0 0
    %114 = vmatpush2.bf16.msra.mxu0 0
    %115 = vmatprep.subr.bf16.mxu0 0
    %116 = vmatpush2.bf16.msra.mxu0 0
    %117 = vmatprep.subr.bf16.mxu0 0
    %118 = vmatpush2.bf16.msra.mxu0 0
    %119 = vmatprep.subr.bf16.mxu0 0
    %120 = vmatpush2.bf16.msra.mxu0 0
    %121 = vmatprep.mubr.bf16.mxu0 0
    %122 = vmatmul.mubr.bf16.gmra.mxu0 %v83
    %v123 = vpop.f32.mrf.mxu0
    %v124 = vadd.f32 0.0, %v123
    %v125 = vpop.f32.mrf.mxu0
    %v126 = vpop.f32.mrf.mxu0
    %v127 = vpop.f32.mrf.mxu0
    %128 = vdwg.mxu0
    %v131 = vunpack.c.l.b16 %v78
    %v132 = vunpack.c.l.b16 %v79
    %v133 = vpack.c.b16 %v132, %v131
    %vm135 = vcmask 130048
    %v137 = vsel %vm135, %v75, 0
    %139 = vmatprep.subr.bf16.mxu0 0
    %140 = vmatpush1.bf16.msra.mxu0 0
    %141 = vmatprep.subr.bf16.mxu0 0
    %142 = vmatpush1.bf16.msra.mxu0 0
    %143 = vmatprep.subr.bf16.mxu0 0
    %144 = vmatpush1.bf16.msra.mxu0 0
    %145 = vmatprep.subr.bf16.mxu0 0
    %146 = vmatpush1.bf16.msra.mxu0 0
    %147 = vmatprep.subr.bf16.mxu0 0
    %148 = vmatpush1.bf16.msra.mxu0 0
    %149 = vmatprep.subr.bf16.mxu0 0
    %150 = vmatpush1.bf16.msra.mxu0 0
    %151 = vmatprep.subr.bf16.mxu0 0
    %152 = vmatpush1.bf16.msra.mxu0 0
    %153 = vmatprep.subr.bf16.mxu0 0
    %154 = vmatpush1.bf16.msra.mxu0 %v133
    %155 = vmatprep.subr.bf16.mxu0 0
    %156 = vmatpush2.bf16.msra.mxu0 0
    %157 = vmatprep.subr.bf16.mxu0 0
    %158 = vmatpush2.bf16.msra.mxu0 0
    %159 = vmatprep.subr.bf16.mxu0 0
    %160 = vmatpush2.bf16.msra.mxu0 0
    %161 = vmatprep.subr.bf16.mxu0 0
    %162 = vmatpush2.bf16.msra.mxu0 0
    %163 = vmatprep.subr.bf16.mxu0 0
    %164 = vmatpush2.bf16.msra.mxu0 0
    %165 = vmatprep.subr.bf16.mxu0 0
    %166 = vmatpush2.bf16.msra.mxu0 0
    %167 = vmatprep.subr.bf16.mxu0 0
    %168 = vmatpush2.bf16.msra.mxu0 0
    %169 = vmatprep.subr.bf16.mxu0 0
    %170 = vmatpush2.bf16.msra.mxu0 0
    %171 = vmatprep.mubr.bf16.mxu0 0
    %172 = vmatmul.mubr.bf16.gmra.mxu0 %v137
    %v173 = vpop.f32.mrf.mxu0
    %v174 = vadd.f32 %v124, %v173
    %v175 = vpop.f32.mrf.mxu0
    %v176 = vpop.f32.mrf.mxu0
    %v177 = vpop.f32.mrf.mxu0
    %178 = vdwg.mxu0
    %v179 = vld [vmem:[%s4] sm:$0x1]
    %v181 = vlaneseq
    %v182 = vshrl.u32 %v181, 7
    %v183 = vsub.s32 0, %v182
    %v184 = vrot.slane %v179, %v183
    %v186 = vadd.f32 %v174, %v184
    %v187 = vmax.f32 %v186, 0.0
    %v188 = vpack.c.bf16 %v187, %v187
    %v189 = vld [vmem:[#allocation4] sm:$0xf]
    %v190 = vld [vmem:[#allocation4 + $0x4] sm:$0xf]
    %v191 = vld [vmem:[#allocation4 + $0x8] sm:$0xf]
    %v192 = vld [vmem:[#allocation4 + $0xc] sm:$0xf]
    %v193 = vld [vmem:[#allocation4 + $0x10] sm:$0xf]
    %v194 = vld [vmem:[#allocation4 + $0x14] sm:$0xf]
    %v195 = vld [vmem:[#allocation4 + $0x18] sm:$0xf]
    %v196 = vld [vmem:[#allocation4 + $0x1c] sm:$0xf]
    %v197 = vld [vmem:[#allocation4 + $0x20] sm:$0xf]
    %v198 = vld [vmem:[#allocation4 + $0x24] sm:$0xf]
    %v199 = vld [vmem:[#allocation4 + $0x28] sm:$0xf]
    %v200 = vld [vmem:[#allocation4 + $0x2c] sm:$0xf]
    %v201 = vld [vmem:[#allocation4 + $0x30] sm:$0xf]
    %v202 = vld [vmem:[#allocation4 + $0x34] sm:$0xf]
    %v203 = vld [vmem:[#allocation4 + $0x38] sm:$0xf]
    %v204 = vld [vmem:[#allocation4 + $0x3c] sm:$0xf]
    %v205 = vld [vmem:[%s6] sm:$0x1]
    %v207 = vlaneseq
    %v208 = vshrl.u32 %v207, 7
    %v209 = vsub.s32 0, %v208
    %v210 = vrot.slane %v205, %v209
    %v228 = vunpack.c.l.b16 %v189
    %v229 = vunpack.c.l.b16 %v190
    %v230 = vunpack.c.l.b16 %v191
    %v231 = vunpack.c.l.b16 %v192
    %v232 = vunpack.c.l.b16 %v193
    %v233 = vunpack.c.l.b16 %v194
    %v234 = vunpack.c.l.b16 %v195
    %v235 = vunpack.c.l.b16 %v196
    %v236 = vunpack.c.l.b16 %v197
    %v237 = vunpack.c.l.b16 %v198
    %v238 = vunpack.c.l.b16 %v199
    %v239 = vunpack.c.l.b16 %v200
    %v240 = vunpack.c.l.b16 %v201
    %v241 = vunpack.c.l.b16 %v202
    %v242 = vunpack.c.l.b16 %v203
    %v243 = vunpack.c.l.b16 %v204
    %v244 = vpack.c.b16 %v229, %v228
    %v245 = vpack.c.b16 %v231, %v230
    %v246 = vpack.c.b16 %v233, %v232
    %v247 = vpack.c.b16 %v235, %v234
    %v248 = vpack.c.b16 %v237, %v236
    %v249 = vpack.c.b16 %v239, %v238
    %v250 = vpack.c.b16 %v241, %v240
    %v251 = vpack.c.b16 %v243, %v242
    %260 = vmatprep.subr.bf16.mxu0 0
    %261 = vmatpush1.bf16.msra.mxu0 %v251
    %262 = vmatprep.subr.bf16.mxu0 0
    %263 = vmatpush1.bf16.msra.mxu0 %v250
    %264 = vmatprep.subr.bf16.mxu0 0
    %265 = vmatpush1.bf16.msra.mxu0 %v249
    %266 = vmatprep.subr.bf16.mxu0 0
    %267 = vmatpush1.bf16.msra.mxu0 %v248
    %268 = vmatprep.subr.bf16.mxu0 0
    %269 = vmatpush1.bf16.msra.mxu0 %v247
    %270 = vmatprep.subr.bf16.mxu0 0
    %271 = vmatpush1.bf16.msra.mxu0 %v246
    %272 = vmatprep.subr.bf16.mxu0 0
    %273 = vmatpush1.bf16.msra.mxu0 %v245
    %274 = vmatprep.subr.bf16.mxu0 0
    %275 = vmatpush1.bf16.msra.mxu0 %v244
    %276 = vmatprep.subr.bf16.mxu0 0
    %277 = vmatpush2.bf16.msra.mxu0 0
    %278 = vmatprep.subr.bf16.mxu0 0
    %279 = vmatpush2.bf16.msra.mxu0 0
    %280 = vmatprep.subr.bf16.mxu0 0
    %281 = vmatpush2.bf16.msra.mxu0 0
    %282 = vmatprep.subr.bf16.mxu0 0
    %283 = vmatpush2.bf16.msra.mxu0 0
    %284 = vmatprep.subr.bf16.mxu0 0
    %285 = vmatpush2.bf16.msra.mxu0 0
    %286 = vmatprep.subr.bf16.mxu0 0
    %287 = vmatpush2.bf16.msra.mxu0 0
    %288 = vmatprep.subr.bf16.mxu0 0
    %289 = vmatpush2.bf16.msra.mxu0 0
    %290 = vmatprep.subr.bf16.mxu0 0
    %291 = vmatpush2.bf16.msra.mxu0 0
    %292 = vmatprep.mubr.bf16.mxu0 0
    %293 = vmatmul.mubr.bf16.gmra.mxu0 %v188
    %v294 = vpop.f32.mrf.mxu0
    %v295 = vadd.f32 %v210, %v294
    %v296 = vpop.f32.mrf.mxu0
    %v297 = vpop.f32.mrf.mxu0
    %v298 = vpop.f32.mrf.mxu0
    %299 = vdwg.mxu0
    %v300 = vmax.f32 %v295, 0.0
    %v301 = vpack.c.bf16 %v300, %v300
    %v302 = vld [vmem:[#allocation6] sm:$0xf]
    %v303 = vld [vmem:[#allocation6 + $0x4] sm:$0xf]
    %v304 = vld [vmem:[#allocation6 + $0x8] sm:$0xf]
    %v305 = vld [vmem:[#allocation6 + $0xc] sm:$0xf]
    %v306 = vld [vmem:[#allocation6 + $0x10] sm:$0xf]
    %v307 = vld [vmem:[#allocation6 + $0x14] sm:$0xf]
    %v308 = vld [vmem:[#allocation6 + $0x18] sm:$0xf]
    %v309 = vld [vmem:[#allocation6 + $0x1c] sm:$0xf]
    %v310 = vld [vmem:[#allocation6 + $0x20] sm:$0xf]
    %v311 = vld [vmem:[#allocation6 + $0x24] sm:$0xf]
    %v312 = vld [vmem:[#allocation6 + $0x28] sm:$0xf]
    %v313 = vld [vmem:[#allocation6 + $0x2c] sm:$0xf]
    %v314 = vld [vmem:[#allocation6 + $0x30] sm:$0xf]
    %v315 = vld [vmem:[#allocation6 + $0x34] sm:$0xf]
    %v316 = vld [vmem:[#allocation6 + $0x38] sm:$0xf]
    %v317 = vld [vmem:[#allocation6 + $0x3c] sm:$0xf]
    %v318 = vld [vmem:[%s8] sm:$0x1]
    %v320 = vlaneseq
    %v321 = vshrl.u32 %v320, 7
    %v322 = vsub.s32 0, %v321
    %v323 = vrot.slane %v318, %v322
    %v341 = vunpack.c.l.b16 %v302
    %v342 = vunpack.c.l.b16 %v303
    %v343 = vunpack.c.l.b16 %v304
    %v344 = vunpack.c.l.b16 %v305
    %v345 = vunpack.c.l.b16 %v306
    %v346 = vunpack.c.l.b16 %v307
    %v347 = vunpack.c.l.b16 %v308
    %v348 = vunpack.c.l.b16 %v309
    %v349 = vunpack.c.l.b16 %v310
    %v350 = vunpack.c.l.b16 %v311
    %v351 = vunpack.c.l.b16 %v312
    %v352 = vunpack.c.l.b16 %v313
    %v353 = vunpack.c.l.b16 %v314
    %v354 = vunpack.c.l.b16 %v315
    %v355 = vunpack.c.l.b16 %v316
    %v356 = vunpack.c.l.b16 %v317
    %v357 = vpack.c.b16 %v342, %v341
    %v358 = vpack.c.b16 %v344, %v343
    %v359 = vpack.c.b16 %v346, %v345
    %v360 = vpack.c.b16 %v348, %v347
    %v361 = vpack.c.b16 %v350, %v349
    %v362 = vpack.c.b16 %v352, %v351
    %v363 = vpack.c.b16 %v354, %v353
    %v364 = vpack.c.b16 %v356, %v355
    %373 = vmatprep.subr.bf16.mxu0 0
    %374 = vmatpush1.bf16.msra.mxu0 %v364
    %375 = vmatprep.subr.bf16.mxu0 0
    %376 = vmatpush1.bf16.msra.mxu0 %v363
    %377 = vmatprep.subr.bf16.mxu0 0
    %378 = vmatpush1.bf16.msra.mxu0 %v362
    %379 = vmatprep.subr.bf16.mxu0 0
    %380 = vmatpush1.bf16.msra.mxu0 %v361
    %381 = vmatprep.subr.bf16.mxu0 0
    %382 = vmatpush1.bf16.msra.mxu0 %v360
    %383 = vmatprep.subr.bf16.mxu0 0
    %384 = vmatpush1.bf16.msra.mxu0 %v359
    %385 = vmatprep.subr.bf16.mxu0 0
    %386 = vmatpush1.bf16.msra.mxu0 %v358
    %387 = vmatprep.subr.bf16.mxu0 0
    %388 = vmatpush1.bf16.msra.mxu0 %v357
    %389 = vmatprep.subr.bf16.mxu0 0
    %390 = vmatpush2.bf16.msra.mxu0 0
    %391 = vmatprep.subr.bf16.mxu0 0
    %392 = vmatpush2.bf16.msra.mxu0 0
    %393 = vmatprep.subr.bf16.mxu0 0
    %394 = vmatpush2.bf16.msra.mxu0 0
    %395 = vmatprep.subr.bf16.mxu0 0
    %396 = vmatpush2.bf16.msra.mxu0 0
    %397 = vmatprep.subr.bf16.mxu0 0
    %398 = vmatpush2.bf16.msra.mxu0 0
    %399 = vmatprep.subr.bf16.mxu0 0
    %400 = vmatpush2.bf16.msra.mxu0 0
    %401 = vmatprep.subr.bf16.mxu0 0
    %402 = vmatpush2.bf16.msra.mxu0 0
    %403 = vmatprep.subr.bf16.mxu0 0
    %404 = vmatpush2.bf16.msra.mxu0 0
    %405 = vmatprep.mubr.bf16.mxu0 0
    %406 = vmatmul.mubr.bf16.gmra.mxu0 %v301
    %v407 = vpop.f32.mrf.mxu0
    %v408 = vadd.f32 %v323, %v407
    %v409 = vpop.f32.mrf.mxu0
    %v410 = vpop.f32.mrf.mxu0
    %v411 = vpop.f32.mrf.mxu0
    %412 = vdwg.mxu0
    %vm413 = vcmask 7168
    %414 = vst.msk [vmem:[%s9] sm:$0xff] %vm413, %v408
    // Predicated region
    $region50: #{tpu_custom_call.1} parent=1 // pred_check
      _
    $region51: #{tpu_custom_call.1} parent=1 // pred_check_branch
      %416 = sbr.rel (0) target = $region53
    $region52: #{tpu_custom_call.1} parent=1 // pred_region
      _
    $region53: #{tpu_custom_call.1} parent=1 // pred_fallthru
      _
    // Predicated region
    $region54: #{tpu_custom_call.1} parent=1 // pred_check
      _
    $region55: #{tpu_custom_call.1} parent=1 // pred_check_branch
      %418 = sbr.rel (0) target = $region57
    $region56: #{tpu_custom_call.1} parent=1 // pred_region
      _
    $region57: #{tpu_custom_call.1} parent=1 // pred_fallthru
      _
    %419 = vsyncpa [#allocation3], 1
    %420 = vsyncpa [#allocation5], 1

</llo_original>
